<compile_context>
chip_gen: v7x
topology: tpu7x:2x2x1
jax: 0.10.0
libtpu: 0.0.40
codegen_flags: <defaults>
</compile_context>

<pallas_src>
import jax
import jax.numpy as jnp
from jax.experimental import pallas as pl
from jax.experimental.pallas import tpu as pltpu

LANE = 128
SUBLANE = 8


def _round_up(x, m):
    return (x + m - 1) // m * m


def gnn_kernel(xy_ref, w1t_ref, b1_ref, aut_ref, w2_ref, b2_ref, out_ref, acc_ref):
    # xy_ref : VMEM (B, 2)        batch of concatenated [x, y]
    # w1t_ref: VMEM (2, tk)       k-tile of lin1.weight^T
    # b1_ref : VMEM (1, tk)       k-tile of lin1.bias
    # aut_ref: VMEM (tk, Np)      k-tile of (diag(u) @ A^T)   [u folded in on host]
    # w2_ref : VMEM (1, Np)       lin2.weight (zero-padded lanes)
    # b2_ref : SMEM (1,)          lin2.bias
    # out_ref: VMEM (B, 1)
    # acc_ref: VMEM (B, Np) f32   accumulator for h2 across k-tiles
    k = pl.program_id(0)

    # h1 k-tile: lin1(xy) restricted to this slice of the N dimension.  (B, tk)
    h1_k = (xy_ref[:, 0:1] * w1t_ref[0:1, :]
            + xy_ref[:, 1:2] * w1t_ref[1:2, :]
            + b1_ref[...])

    @pl.when(k == 0)
    def _():
        acc_ref[...] = jnp.zeros_like(acc_ref)

    # h2 += h1_k @ (diag(u) @ A^T)_k   == A @ U @ h1 restricted to this k-tile.
    acc_ref[...] += jnp.dot(h1_k, aut_ref[...], preferred_element_type=jnp.float32)

    @pl.when(k == pl.num_programs(0) - 1)
    def _():
        h3 = jax.nn.sigmoid(acc_ref[...])                               # (B, Np)
        h4 = jnp.sum(h3 * w2_ref[...], axis=-1, keepdims=True) + b2_ref[0]
        out_ref[...] = jax.nn.sigmoid(h4)                               # (B, 1)


def prepare_params(params):
    """One-time host-side layout prep: transpose, fold diag(u) into A, pad lanes."""
    n = params["A"].shape[0]
    n_pad = _round_up(max(n, LANE), LANE)

    w1t = jnp.zeros((2, n_pad), jnp.float32).at[:, :n].set(
        params["w1"].T.astype(jnp.float32))
    b1 = jnp.zeros((1, n_pad), jnp.float32).at[0, :n].set(
        params["b1"].astype(jnp.float32))
    # Fold diag(u) into the (transposed) adjacency:  h1_row @ (u[:,None]*A^T) == A @ U @ h1
    a_ut = jnp.zeros((n_pad, n_pad), jnp.float32).at[:n, :n].set(
        (params["u"][:, None] * params["A"].T).astype(jnp.float32))
    # Zero-pad w2 so padded lanes (sigmoid(0)=0.5) contribute nothing to h4.
    w2 = jnp.zeros((1, n_pad), jnp.float32).at[0, :n].set(
        params["w2"].reshape(-1).astype(jnp.float32))
    b2 = params["b2"].reshape(1).astype(jnp.float32)

    return {"w1t": w1t, "b1": b1, "a_ut": a_ut, "w2": w2, "b2": b2, "n_pad": n_pad}


def gnn_forward_batch(xy, prep, *, tk=None):
    """xy: (B, 2) batch of [x, y] pairs. Returns (B, 1)."""
    b = xy.shape[0]
    n_pad = prep["n_pad"]
    b_pad = _round_up(max(b, SUBLANE), SUBLANE)

    xy_p = jnp.zeros((b_pad, 2), jnp.float32).at[:b].set(xy.astype(jnp.float32))

    if tk is None:
        tk = min(n_pad, 512)          # double-buffered (tk, n_pad) f32 tiles
    assert n_pad % tk == 0
    grid = (n_pad // tk,)

    out = pl.pallas_call(
        gnn_kernel,
        out_shape=jax.ShapeDtypeStruct((b_pad, 1), jnp.float32),
        grid_spec=pltpu.PrefetchScalarGridSpec(
            num_scalar_prefetch=0,
            grid=grid,
            in_specs=[
                pl.BlockSpec((b_pad, 2), lambda k: (0, 0)),      # xy (resident)
                pl.BlockSpec((2, tk), lambda k: (0, k)),         # w1^T k-tile
                pl.BlockSpec((1, tk), lambda k: (0, k)),         # b1 k-tile
                pl.BlockSpec((tk, n_pad), lambda k: (k, 0)),     # (diag(u) A^T) k-tile
                pl.BlockSpec((1, n_pad), lambda k: (0, 0)),      # w2 (resident)
                pl.BlockSpec(memory_space=pltpu.MemorySpace.SMEM),  # b2 scalar
            ],
            out_specs=pl.BlockSpec((b_pad, 1), lambda k: (0, 0)),
            scratch_shapes=[pltpu.VMEM((b_pad, n_pad), jnp.float32)],
        ),
        compiler_params=pltpu.CompilerParams(
            dimension_semantics=("arbitrary",)),
    )(xy_p, prep["w1t"], prep["b1"], prep["a_ut"], prep["w2"], prep["b2"])
    return out[:b]


def gnn_forward(x, y, prep):
    """x, y: shape (1,) each. Returns shape (1,) like the PyTorch module."""
    xy = jnp.concatenate([x, y]).astype(jnp.float32).reshape(1, 2)
    return gnn_forward_batch(xy, prep).reshape(1)


def ref_forward(x, y, params):
    xy = jnp.concatenate([x, y]).astype(jnp.float32)
    h1 = params["w1"] @ xy + params["b1"]                 # (N,)
    h2 = params["A"] @ (params["u"] * h1)                 # A @ U @ h1
    h3 = jax.nn.sigmoid(h2)
    h4 = params["w2"] @ h3 + params["b2"]                 # (1,)
    return jax.nn.sigmoid(h4)


def make_params(key, n):
    kd, ka, k1w, k1b, k2w, k2b = jax.random.split(key, 6)

    # Synthetic "data" tensor (N, 3): X = data[:, :2], U = diag(data[:, 2]).
    data = jax.random.normal(kd, (n, 3), dtype=jnp.float32)
    u = data[:, 2]

    # TODO(synk): generate_adjacency uses scipy Delaunay + networkx; replaced
    # here with a deterministic synthetic symmetric 0/1 adjacency (zero diag).
    r = jax.random.uniform(ka, (n, n), dtype=jnp.float32)
    s = r + r.T
    A = (s > 1.2).astype(jnp.float32)
    A = A * (1.0 - jnp.eye(n, dtype=jnp.float32))

    # torch.nn.Linear default init: U(-1/sqrt(fan_in), 1/sqrt(fan_in))
    b1lim = 1.0 / jnp.sqrt(2.0)
    b2lim = 1.0 / jnp.sqrt(float(n))
    w1 = jax.random.uniform(k1w, (n, 2), jnp.float32, -b1lim, b1lim)
    b1 = jax.random.uniform(k1b, (n,), jnp.float32, -b1lim, b1lim)
    w2 = jax.random.uniform(k2w, (1, n), jnp.float32, -b2lim, b2lim)
    b2 = jax.random.uniform(k2b, (1,), jnp.float32, -b2lim, b2lim)

    return {"w1": w1, "b1": b1, "w2": w2, "b2": b2, "u": u, "A": A}


if __name__ == "__main__":
    N = 32  # data.shape[0]
    B = 16  # batched (x, y) pairs to exercise the MXU rows
    key = jax.random.PRNGKey(0)
    kp, kx, ky, kb = jax.random.split(key, 4)

    params = make_params(kp, N)
    prep = prepare_params(params)       # layout prep done ONCE, not per call

    # --- single (x, y) forward, matching the PyTorch module signature ---
    x = jax.random.normal(kx, (1,), dtype=jnp.float32)
    y = jax.random.normal(ky, (1,), dtype=jnp.float32)

    out = gnn_forward(x, y, prep)
    out = jax.block_until_ready(out)
    ref = ref_forward(x, y, params)
    assert out.shape == (1,)
    assert jnp.allclose(out, ref, atol=1e-5, rtol=1e-5), (out, ref)

    # --- batched forward (amortizes launch cost, fills MXU rows) ---
    xy_b = jax.random.normal(kb, (B, 2), dtype=jnp.float32)
    out_b = gnn_forward_batch(xy_b, prep)
    out_b = jax.block_until_ready(out_b)
    ref_b = jax.vmap(lambda p: ref_forward(p[0:1], p[1:2], params))(xy_b)
    assert out_b.shape == (B, 1)
    assert jnp.allclose(out_b, ref_b, atol=1e-5, rtol=1e-5), (out_b, ref_b)

    print("KERNEL_OK")
</pallas_src>

<mosaic_0001>
module attributes {stable_mosaic.version = 11 : i64} {
  func.func @gnn_kernel(%arg0: i32, %arg1: memref<8x2xf32, #tpu.memory_space<vmem>>, %arg2: memref<2x128xf32, #tpu.memory_space<vmem>>, %arg3: memref<1x128xf32, #tpu.memory_space<vmem>>, %arg4: memref<128x128xf32, #tpu.memory_space<vmem>>, %arg5: memref<1x128xf32, #tpu.memory_space<vmem>>, %arg6: memref<1xf32, #tpu.memory_space<smem>>, %arg7: memref<8x1xf32, #tpu.memory_space<vmem>>, %arg8: memref<8x128xf32, #tpu.memory_space<vmem>>) attributes {dimension_semantics = [#tpu.dimension_semantics<arbitrary>], iteration_bounds = array<i64: 1>, scalar_prefetch = 0 : i64, scratch_operands = 1 : i64, tpu.core_type = #tpu.core_type<tc>, window_params = [{pipeline_mode = #tpu.pipeline_mode<synchronous>, transform_indices = @transform_0, window_bounds = array<i64: 8, 2>}, {transform_indices = @transform_1, window_bounds = array<i64: 2, 128>}, {transform_indices = @transform_2, window_bounds = array<i64: 1, 128>}, {transform_indices = @transform_3, window_bounds = array<i64: 128, 128>}, {pipeline_mode = #tpu.pipeline_mode<synchronous>, transform_indices = @transform_4, window_bounds = array<i64: 1, 128>}, {transform_indices = @transform_5, window_bounds = array<i64: 1>}, {pipeline_mode = #tpu.pipeline_mode<synchronous>, transform_indices = @transform_6, window_bounds = array<i64: 8, 1>}]} {
    %c0 = arith.constant 0 : index
    %c0_0 = arith.constant 0 : index
    %0 = vector.load %arg1[%c0, %c0_0] : memref<8x2xf32, #tpu.memory_space<vmem>>, vector<8x1xf32>
    %c0_1 = arith.constant 0 : index
    %c0_2 = arith.constant 0 : index
    %1 = vector.load %arg2[%c0_1, %c0_2] : memref<2x128xf32, #tpu.memory_space<vmem>>, vector<1x128xf32>
    %2 = vector.broadcast %0 : vector<8x1xf32> to vector<8x128xf32>
    %3 = vector.broadcast %1 : vector<1x128xf32> to vector<8x128xf32>
    %4 = arith.mulf %2, %3 : vector<8x128xf32>
    %c0_3 = arith.constant 0 : index
    %c1 = arith.constant 1 : index
    %5 = vector.load %arg1[%c0_3, %c1] : memref<8x2xf32, #tpu.memory_space<vmem>>, vector<8x1xf32>
    %c1_4 = arith.constant 1 : index
    %c0_5 = arith.constant 0 : index
    %6 = vector.load %arg2[%c1_4, %c0_5] : memref<2x128xf32, #tpu.memory_space<vmem>>, vector<1x128xf32>
    %7 = vector.broadcast %5 : vector<8x1xf32> to vector<8x128xf32>
    %8 = vector.broadcast %6 : vector<1x128xf32> to vector<8x128xf32>
    %9 = arith.mulf %7, %8 : vector<8x128xf32>
    %10 = arith.addf %4, %9 : vector<8x128xf32>
    %c0_6 = arith.constant 0 : index
    %c0_7 = arith.constant 0 : index
    %11 = vector.load %arg3[%c0_6, %c0_7] : memref<1x128xf32, #tpu.memory_space<vmem>>, vector<1x128xf32>
    %12 = vector.broadcast %11 : vector<1x128xf32> to vector<8x128xf32>
    %13 = arith.addf %10, %12 : vector<8x128xf32>
    %c0_i32 = arith.constant 0 : i32
    %14 = arith.cmpi eq, %arg0, %c0_i32 : i32
    %15 = arith.extui %14 : i1 to i32
    %c0_i32_8 = arith.constant 0 : i32
    %16 = arith.cmpi ne, %15, %c0_i32_8 : i32
    scf.if %16 {
      %cst_17 = arith.constant 0.000000e+00 : f32
      %25 = vector.broadcast %cst_17 : f32 to vector<8x128xf32>
      %c0_18 = arith.constant 0 : index
      %c0_19 = arith.constant 0 : index
      %26 = vector.load %arg8[%c0_18, %c0_19] : memref<8x128xf32, #tpu.memory_space<vmem>>, vector<8x128xf32>
      tpu.vector_store %arg8[%c0_18, %c0_19], %25 {strides = array<i32>} : memref<8x128xf32, #tpu.memory_space<vmem>>, vector<8x128xf32>,
    } else {
    }
    %c0_9 = arith.constant 0 : index
    %c0_10 = arith.constant 0 : index
    %17 = vector.load %arg8[%c0_9, %c0_10] : memref<8x128xf32, #tpu.memory_space<vmem>>, vector<8x128xf32>
    %c0_11 = arith.constant 0 : index
    %c0_12 = arith.constant 0 : index
    %18 = vector.load %arg4[%c0_11, %c0_12] : memref<128x128xf32, #tpu.memory_space<vmem>>, vector<128x128xf32>
    %cst = arith.constant dense<0.000000e+00> : vector<8x128xf32>
    %19 = tpu.matmul %13, %18, %cst {dimension_numbers = #tpu.dot_dimension_numbers<[1], [0], [0], [1], [0, 0, 1, 1], [], []>} : vector<8x128xf32>, vector<128x128xf32>, vector<8x128xf32> -> vector<8x128xf32>
    %20 = arith.addf %17, %19 : vector<8x128xf32>
    %c0_13 = arith.constant 0 : index
    %c0_14 = arith.constant 0 : index
    %21 = vector.load %arg8[%c0_13, %c0_14] : memref<8x128xf32, #tpu.memory_space<vmem>>, vector<8x128xf32>
    tpu.vector_store %arg8[%c0_13, %c0_14], %20 {strides = array<i32>} : memref<8x128xf32, #tpu.memory_space<vmem>>, vector<8x128xf32>,
    %c0_i32_15 = arith.constant 0 : i32
    %22 = arith.cmpi eq, %arg0, %c0_i32_15 : i32
    %23 = arith.extui %22 : i1 to i32
    %c0_i32_16 = arith.constant 0 : i32
    %24 = arith.cmpi ne, %23, %c0_i32_16 : i32
    scf.if %24 {
      %c0_17 = arith.constant 0 : index
      %c0_18 = arith.constant 0 : index
      %25 = vector.load %arg8[%c0_17, %c0_18] : memref<8x128xf32, #tpu.memory_space<vmem>>, vector<8x128xf32>
      %26 = arith.negf %25 : vector<8x128xf32>
      %27 = math.exp %26 : vector<8x128xf32>
      %cst_19 = arith.constant 1.000000e+00 : f32
      %28 = vector.broadcast %cst_19 : f32 to vector<8x128xf32>
      %29 = arith.addf %28, %27 : vector<8x128xf32>
      %30 = arith.divf %28, %29 : vector<8x128xf32>
      %c0_20 = arith.constant 0 : index
      %c0_21 = arith.constant 0 : index
      %31 = vector.load %arg5[%c0_20, %c0_21] : memref<1x128xf32, #tpu.memory_space<vmem>>, vector<1x128xf32>
      %32 = vector.broadcast %31 : vector<1x128xf32> to vector<8x128xf32>
      %33 = arith.mulf %30, %32 : vector<8x128xf32>
      %cst_22 = arith.constant dense<0.000000e+00> : vector<8xf32>
      %34 = vector.multi_reduction <add>, %33, %cst_22 [1] : vector<8x128xf32> to vector<8xf32>
      %35 = vector.shape_cast %34 : vector<8xf32> to vector<8x1xf32>
      %c0_23 = arith.constant 0 : index
      %36 = memref.load %arg6[%c0_23] : memref<1xf32, #tpu.memory_space<smem>>
      %37 = vector.broadcast %36 : f32 to vector<8x1xf32>
      %38 = arith.addf %35, %37 : vector<8x1xf32>
      %39 = arith.negf %38 : vector<8x1xf32>
      %40 = math.exp %39 : vector<8x1xf32>
      %cst_24 = arith.constant 1.000000e+00 : f32
      %41 = vector.broadcast %cst_24 : f32 to vector<8x1xf32>
      %42 = arith.addf %41, %40 : vector<8x1xf32>
      %43 = arith.divf %41, %42 : vector<8x1xf32>
      %c0_25 = arith.constant 0 : index
      %c0_26 = arith.constant 0 : index
      %44 = vector.load %arg7[%c0_25, %c0_26] : memref<8x1xf32, #tpu.memory_space<vmem>>, vector<8x1xf32>
      tpu.vector_store %arg7[%c0_25, %c0_26], %43 {strides = array<i32>} : memref<8x1xf32, #tpu.memory_space<vmem>>, vector<8x1xf32>,
    } else {
    }
    return
  }
  func.func @transform_0(%arg0: i32) -> (i32, i32) {
    %c0_i32 = arith.constant 0 : i32
    %c0_i32_0 = arith.constant 0 : i32
    %c0_i32_1 = arith.constant 0 : i32
    return %c0_i32, %c0_i32_0 : i32, i32
  }
  func.func @transform_1(%arg0: i32) -> (i32, i32) {
    %c0_i32 = arith.constant 0 : i32
    %c0_i32_0 = arith.constant 0 : i32
    return %c0_i32, %arg0 : i32, i32
  }
  func.func @transform_2(%arg0: i32) -> (i32, i32) {
    %c0_i32 = arith.constant 0 : i32
    %c0_i32_0 = arith.constant 0 : i32
    return %c0_i32, %arg0 : i32, i32
  }
  func.func @transform_3(%arg0: i32) -> (i32, i32) {
    %c0_i32 = arith.constant 0 : i32
    %c0_i32_0 = arith.constant 0 : i32
    return %arg0, %c0_i32 : i32, i32
  }
  func.func @transform_4(%arg0: i32) -> (i32, i32) {
    %c0_i32 = arith.constant 0 : i32
    %c0_i32_0 = arith.constant 0 : i32
    %c0_i32_1 = arith.constant 0 : i32
    return %c0_i32, %c0_i32_0 : i32, i32
  }
  func.func @transform_5(%arg0: i32) -> i32 {
    %c0_i32 = arith.constant 0 : i32
    %c0_i32_0 = arith.constant 0 : i32
    return %c0_i32 : i32
  }
  func.func @transform_6(%arg0: i32) -> (i32, i32) {
    %c0_i32 = arith.constant 0 : i32
    %c0_i32_0 = arith.constant 0 : i32
    %c0_i32_1 = arith.constant 0 : i32
    return %c0_i32, %c0_i32_0 : i32, i32
  }
}

</mosaic_0001>

<llo_original>
// kernel: tpu_custom_call.1
$region0: #{tpu_custom_call.1}
  #allocation0 [shape = 'u32[]', space=smem, size = 0x4, offset = 0x4, fixed_abs, tag = 'smem constant byte address 0x4 - core index']
  #allocation1 [shape = 'u32[144,128]{1,0:T(1,128)}', space=vmem, size = 0x12000, scoped, tag = 'internal scratch']
  #allocation2 [shape = 'f32[8,128]{1,0:T(8,128)}', space=vmem, size = 0x1000, scoped, tag = 'scratch operand']
  #allocation3 [shape = 'f32[1]{0:T(128)S(6)}', space=smem, size = 0x200, scoped, tag = 'scoped memory for tpu_custom_call.1']
  %s0 = inlined_call_operand.vmem [shape: f32[8,2], index: 0, kind: input, shape index: {}]
  %s1 = inlined_call_operand.vmem [shape: f32[2,128], index: 1, kind: input, shape index: {}]
  %s2 = inlined_call_operand.vmem [shape: f32[1,128], index: 2, kind: input, shape index: {}]
  %s3 = inlined_call_operand.hbm [shape: f32[128,128], index: 3, kind: input, shape index: {}]
  %s4 = inlined_call_operand.vmem [shape: f32[1,128], index: 4, kind: input, shape index: {}]
  %s5 = inlined_call_operand.<no memory space> [shape: f32[1], index: 5, kind: input, shape index: {}]
  %s6 = inlined_call_operand.vmem [shape: f32[8,1], index: 6, kind: output, shape index: {}]
  %s7 = sld [smem:[#allocation0]]
  $region46: #{tpu_custom_call.1} parent=0
    _
  %s9 = ssub.s32 1, %s7
  %s10 = scalar_select 0, %s9, %s7
  %11 = sst [smem:[#allocation3]] %s5
  $region1: #{tpu_custom_call.1} parent=0
    #allocation4 [shape = 'u8[65536]{0}', space=vmem, size = 0x10000, scoped, tag = 'input window, operand 3, single buffered']
    #allocation5 [shape = 's32[1]{0}', space=sflag, size = 0x4, scoped, tag = 'scoped memory for tpu_custom_call.1']
    %12 = vsyncpa [#allocation5], 0
    // Predicated region
    $region2: #{tpu_custom_call.1} parent=1 // pred_check
      _
    $region3: #{tpu_custom_call.1} parent=1 // pred_check_branch
      %14 = sbr.rel (0) target = $region5
    $region4: #{tpu_custom_call.1} parent=1 // pred_region
      _
    $region5: #{tpu_custom_call.1} parent=1 // pred_fallthru
      _
    // Predicated region
    $region6: #{tpu_custom_call.1} parent=1 // pred_check
      _
    $region7: #{tpu_custom_call.1} parent=1 // pred_check_branch
      %16 = sbr.rel (0) target = $region9
    $region8: #{tpu_custom_call.1} parent=1 // pred_region
      _
    $region9: #{tpu_custom_call.1} parent=1 // pred_fallthru
      _
    // Predicated region
    $region10: #{tpu_custom_call.1} parent=1 // pred_check
      _
    $region11: #{tpu_custom_call.1} parent=1 // pred_check_branch
      %18 = sbr.rel (0) target = $region13
    $region12: #{tpu_custom_call.1} parent=1 // pred_region
      _
    $region13: #{tpu_custom_call.1} parent=1 // pred_fallthru
      _
    // Predicated region
    $region14: #{tpu_custom_call.1} parent=1 // pred_check
      _
    $region15: #{tpu_custom_call.1} parent=1 // pred_check_branch
      %20 = sbr.rel (0) target = $region17
    $region16: #{tpu_custom_call.1} parent=1 // pred_region
      %s22 = ssub.s32 2048, 2048
      %23 = vsyncadd [#allocation5], %s22
      %s24 = sshll.u32 [#allocation4], 4
      %s25 = int_to_ptr.vmem [resolvable:$true] %s24
      %30 = dma.hbm_to_vmem [thread:$0]  %s3, 2048, %s25, [#allocation5], 128, 128, 8
    $region17: #{tpu_custom_call.1} parent=1 // pred_fallthru
      _
    // Predicated region
    $region18: #{tpu_custom_call.1} parent=1 // pred_check
      _
    $region19: #{tpu_custom_call.1} parent=1 // pred_check_branch
      %32 = sbr.rel (0) target = $region21
    $region20: #{tpu_custom_call.1} parent=1 // pred_region
      _
    $region21: #{tpu_custom_call.1} parent=1 // pred_fallthru
      _
    // Predicated region
    $region22: #{tpu_custom_call.1} parent=1 // pred_check
      _
    $region23: #{tpu_custom_call.1} parent=1 // pred_check_branch
      %34 = sbr.rel (0) target = $region25
    $region24: #{tpu_custom_call.1} parent=1 // pred_region
      _
    $region25: #{tpu_custom_call.1} parent=1 // pred_fallthru
      _
    // Predicated region
    $region26: #{tpu_custom_call.1} parent=1 // pred_check
      _
    $region27: #{tpu_custom_call.1} parent=1 // pred_check_branch
      %36 = sbr.rel (0) target = $region29
    $region28: #{tpu_custom_call.1} parent=1 // pred_region
      %37 = dma.done [#allocation5], 2048
    $region29: #{tpu_custom_call.1} parent=1 // pred_fallthru
      _
    %v38 = vld [vmem:[%s0] sm:$0xff]
    %v39 = vld [vmem:[%s1] sm:$0x1]
    %41 = vset.pattern.permute.xlu0 0
    %42 = vperm.xlu0 %41, %v38
    %v43 = vpop.permute.xlu0 %42
    %v45 = vlaneseq
    %v46 = vshrl.u32 %v45, 7
    %v47 = vsub.s32 0, %v46
    %v48 = vrot.slane %v39, %v47
    %v49 = vmul.f32 %v43, %v48
    %v50 = vld [vmem:[%s1 + $0x1] sm:$0x1]
    %51 = vset.pattern.permute.xlu0 1
    %52 = vperm.xlu0 %51, %v38
    %v53 = vpop.permute.xlu0 %52
    %v55 = vlaneseq
    %v56 = vshrl.u32 %v55, 7
    %v57 = vsub.s32 0, %v56
    %v58 = vrot.slane %v50, %v57
    %v59 = vmul.f32 %v53, %v58
    %v60 = vadd.f32 %v49, %v59
    %v61 = vld [vmem:[%s2] sm:$0x1]
    %v63 = vlaneseq
    %v64 = vshrl.u32 %v63, 7
    %v65 = vsub.s32 0, %v64
    %v66 = vrot.slane %v61, %v65
    %v68 = vadd.f32 %v60, %v66
    %p69 = scmp.eq.s32.totalorder 0, 0
    // Predicated region
    $region30: #{tpu_custom_call.1} parent=1 // pred_check
      %p70 = pneg %p69
    $region31: #{tpu_custom_call.1} parent=1 // pred_check_branch
      %72 = sbr.rel (%p70) target = $region33
    $region32: #{tpu_custom_call.1} parent=1 // pred_region
      %73 = vst [vmem:[#allocation2] sm:$0xff] 0.0
    $region33: #{tpu_custom_call.1} parent=1 // pred_fallthru
      _
    %v74 = vld [vmem:[#allocation2] sm:$0xff]
    %v75 = vld [vmem:[#allocation4] sm:$0xff]
    %v76 = vld [vmem:[#allocation4 + $0x8] sm:$0xff]
    %v77 = vld [vmem:[#allocation4 + $0x10] sm:$0xff]
    %v78 = vld [vmem:[#allocation4 + $0x18] sm:$0xff]
    %v79 = vld [vmem:[#allocation4 + $0x20] sm:$0xff]
    %v80 = vld [vmem:[#allocation4 + $0x28] sm:$0xff]
    %v81 = vld [vmem:[#allocation4 + $0x30] sm:$0xff]
    %v82 = vld [vmem:[#allocation4 + $0x38] sm:$0xff]
    %v83 = vld [vmem:[#allocation4 + $0x40] sm:$0xff]
    %v84 = vld [vmem:[#allocation4 + $0x48] sm:$0xff]
    %v85 = vld [vmem:[#allocation4 + $0x50] sm:$0xff]
    %v86 = vld [vmem:[#allocation4 + $0x58] sm:$0xff]
    %v87 = vld [vmem:[#allocation4 + $0x60] sm:$0xff]
    %v88 = vld [vmem:[#allocation4 + $0x68] sm:$0xff]
    %v89 = vld [vmem:[#allocation4 + $0x70] sm:$0xff]
    %v90 = vld [vmem:[#allocation4 + $0x78] sm:$0xff]
    %91 = vmatprep.subr.mxu0 0.0
    %92 = vmatpush1.msra.mxu0 %v75
    %93 = vmatprep.subr.mxu0 0.0
    %94 = vmatpush1.msra.mxu0 %v76
    %95 = vmatprep.subr.mxu0 0.0
    %96 = vmatpush1.msra.mxu0 %v77
    %97 = vmatprep.subr.mxu0 0.0
    %98 = vmatpush1.msra.mxu0 %v78
    %99 = vmatprep.subr.mxu0 0.0
    %100 = vmatpush1.msra.mxu0 %v79
    %101 = vmatprep.subr.mxu0 0.0
    %102 = vmatpush1.msra.mxu0 %v80
    %103 = vmatprep.subr.mxu0 0.0
    %104 = vmatpush1.msra.mxu0 %v81
    %105 = vmatprep.subr.mxu0 0.0
    %106 = vmatpush1.msra.mxu0 %v82
    %107 = vmatprep.subr.mxu0 0.0
    %108 = vmatpush1.msra.mxu0 %v83
    %109 = vmatprep.subr.mxu0 0.0
    %110 = vmatpush1.msra.mxu0 %v84
    %111 = vmatprep.subr.mxu0 0.0
    %112 = vmatpush1.msra.mxu0 %v85
    %113 = vmatprep.subr.mxu0 0.0
    %114 = vmatpush1.msra.mxu0 %v86
    %115 = vmatprep.subr.mxu0 0.0
    %116 = vmatpush1.msra.mxu0 %v87
    %117 = vmatprep.subr.mxu0 0.0
    %118 = vmatpush1.msra.mxu0 %v88
    %119 = vmatprep.subr.mxu0 0.0
    %120 = vmatpush1.msra.mxu0 %v89
    %121 = vmatprep.subr.mxu0 0.0
    %122 = vmatpush1.msra.mxu0 %v90
    %123 = vmatprep.subr.mxu0 0.0
    %124 = vmatpush1.msra.mxu0 0.0
    %125 = vmatprep.subr.mxu0 0.0
    %126 = vmatpush1.msra.mxu0 0.0
    %127 = vmatprep.subr.mxu0 0.0
    %128 = vmatpush1.msra.mxu0 0.0
    %129 = vmatprep.subr.mxu0 0.0
    %130 = vmatpush1.msra.mxu0 0.0
    %131 = vmatprep.subr.mxu0 0.0
    %132 = vmatpush1.msra.mxu0 0.0
    %133 = vmatprep.subr.mxu0 0.0
    %134 = vmatpush1.msra.mxu0 0.0
    %135 = vmatprep.subr.mxu0 0.0
    %136 = vmatpush1.msra.mxu0 0.0
    %137 = vmatprep.subr.mxu0 0.0
    %138 = vmatpush1.msra.mxu0 0.0
    %139 = vmatprep.subr.mxu0 0.0
    %140 = vmatpush1.msra.mxu0 0.0
    %141 = vmatprep.subr.mxu0 0.0
    %142 = vmatpush1.msra.mxu0 0.0
    %143 = vmatprep.subr.mxu0 0.0
    %144 = vmatpush1.msra.mxu0 0.0
    %145 = vmatprep.subr.mxu0 0.0
    %146 = vmatpush1.msra.mxu0 0.0
    %147 = vmatprep.subr.mxu0 0.0
    %148 = vmatpush1.msra.mxu0 0.0
    %149 = vmatprep.subr.mxu0 0.0
    %150 = vmatpush1.msra.mxu0 0.0
    %151 = vmatprep.subr.mxu0 0.0
    %152 = vmatpush1.msra.mxu0 0.0
    %153 = vmatprep.subr.mxu0 0.0
    %154 = vmatpush1.msra.mxu0 0.0
    %155 = vmatprep.mubr.f32.mxu0 0.0
    %156 = vmatmul.mubr.f32.gmra.mrb[0].mxu0 %v68
    %v157 = vpop.f32.mrb[0].mxu0
    %v158 = vadd.f32 0.0, %v157
    %v159 = vpop.f32.mrb[0].mxu0
    %160 = vdwg.mxu0
    %v161 = vadd.f32 %v74, %v158
    %162 = vst [vmem:[#allocation2] sm:$0xff] %v161
    // Predicated region
    $region34: #{tpu_custom_call.1} parent=1 // pred_check
      %p163 = pneg %p69
    $region35: #{tpu_custom_call.1} parent=1 // pred_check_branch
      %165 = sbr.rel (%p163) target = $region37
    $region36: #{tpu_custom_call.1} parent=1 // pred_region
      %v166 = vld [vmem:[#allocation2] sm:$0xff]
      %v167 = vxor.u32 %v166, 2147483648
      %v168 = vmul.f32 %v167, 1.442695
      %v169 = vpow.pop %v168
      %v170 = vadd.f32 %v169, 1.0
      %v171 = vrcp.pop %v170
      %v172 = vmul.f32 1.0, %v171
      %v173 = vld [vmem:[%s4] sm:$0x1]
      %v175 = vlaneseq
      %v176 = vshrl.u32 %v175, 7
      %v177 = vsub.s32 0, %v176
      %v178 = vrot.slane %v173, %v177
      %v180 = vmul.f32 %v172, %v178
      %181 = vadd.xlane.f32.xlu0 %v180
      %v182 = vpop.xlane.xlu0 %181
      %s183 = sld [smem:[#allocation3]]
      %v184 = vstv %s183
      %v185 = vadd.f32 %v182, %v184
      %v186 = vxor.u32 %v185, 2147483648
      %v187 = vmul.f32 %v186, 1.442695
      %v188 = vpow.pop %v187
      %v189 = vadd.f32 %v188, 1.0
      %v190 = vrcp.pop %v189
      %v191 = vmul.f32 1.0, %v190
      %vm192 = vcmask 7168
      %193 = vst.msk [vmem:[%s6] sm:$0xff] %vm192, %v191
    $region37: #{tpu_custom_call.1} parent=1 // pred_fallthru
      _
    // Predicated region
    $region38: #{tpu_custom_call.1} parent=1 // pred_check
      _
    $region39: #{tpu_custom_call.1} parent=1 // pred_check_branch
      %195 = sbr.rel (0) target = $region41
    $region40: #{tpu_custom_call.1} parent=1 // pred_region
      _
    $region41: #{tpu_custom_call.1} parent=1 // pred_fallthru
      _
    // Predicated region
    $region42: #{tpu_custom_call.1} parent=1 // pred_check
      _
    $region43: #{tpu_custom_call.1} parent=1 // pred_check_branch
      %197 = sbr.rel (0) target = $region45
    $region44: #{tpu_custom_call.1} parent=1 // pred_region
      _
    $region45: #{tpu_custom_call.1} parent=1 // pred_fallthru
      _
    %198 = vsyncpa [#allocation5], 1

</llo_original>
